<compile_context>
chip_gen: v7x
topology: tpu7x:2x2x1
jax: 0.10.0
libtpu: 0.0.40
codegen_flags: <defaults>
</compile_context>

<pallas_src>
import jax
import jax.numpy as jnp
from jax.experimental import pallas as pl
from jax.experimental.pallas import tpu as pltpu


def _linear_predictor_kernel(x_ref, w_ref, b_ref, o_ref):
    # x_ref: (tm, C_in)    tile of the flattened (B*T, C_in) input
    # w_ref: (C_in, C_pad) resident weight (transposed + lane-padded)
    # b_ref: (1, C_out)    resident f32 bias row (unpadded)
    # o_ref: (tm, C_out)   output tile written at the true C_out width
    acc = jnp.dot(x_ref[...], w_ref[...], preferred_element_type=jnp.float32)
    c_out = o_ref.shape[-1]
    o_ref[...] = (acc[:, :c_out] + b_ref[...]).astype(o_ref.dtype)


def _round_up(x, m):
    return ((x + m - 1) // m) * m


def _vmem_budgets():
    # Conservative by default (v7x: 64 MiB physical VMEM per TensorCore); only
    # raise budgets when the hardware positively reports a 128-MiB part.
    tile_budget, vmem_cap = 24 << 20, 48 << 20
    try:
        if int(pltpu.get_tpu_info().vmem_capacity_bytes) >= (128 << 20):
            tile_budget, vmem_cap = 48 << 20, 96 << 20
    except Exception:
        pass
    return tile_budget, vmem_cap


def prepare_linear_params(weight, bias, *, param_dtype=jnp.float32):
    """One-time parameter prep (hoisted out of the per-call path).

    weight: (C_out, C_in) Conv1d(k=1) weight (kernel dim squeezed)
    bias:   (C_out,)
    Returns (w_padded, b_row): (C_in, C_pad) weight with C_pad = round_up(C_out, 128)
    so the MXU N-dim stays lane-dense, and a (1, C_out) f32 bias row.
    """
    C_out, C_in = weight.shape
    C_pad = _round_up(C_out, 128)
    w = weight.T.astype(param_dtype)                       # (C_in, C_out)
    if C_pad != C_out:
        w = jnp.pad(w, ((0, 0), (0, C_pad - C_out)))
    b = bias.reshape(1, C_out).astype(jnp.float32)
    return w, b


def linear_predictor_prepared(x, w_padded, b_row, *, tm=1024, out_dtype=None):
    """Forward with pre-prepared params. x: (B, T, C_in) -> (B, T, C_out)."""
    B, T, C_in = x.shape
    C_pad = w_padded.shape[1]
    C_out = b_row.shape[1]
    out_dtype = jnp.dtype(x.dtype if out_dtype is None else out_dtype)

    M = B * T
    x2d = x.reshape(M, C_in)

    dsize_x = jnp.dtype(x.dtype).itemsize
    dsize_w = jnp.dtype(w_padded.dtype).itemsize
    dsize_o = out_dtype.itemsize

    tile_budget, vmem_cap = _vmem_budgets()

    # --- row-tile selection -------------------------------------------------
    tm = max(8, (int(tm) // 8) * 8)                        # multiple of 8
    tm = min(tm, _round_up(M, 8))                          # don't exceed data
    # Target >= ~4 pipeline steps per TensorCore (assume 2 TCs, v7x worst
    # case) so prefetch / compute / writeback overlap across grid steps, but
    # keep tm >= 512 for DMA efficiency when M is large enough.
    depth_tm = _round_up(-(-M // (4 * 2)), 8)
    tm = min(tm, max(512, depth_tm))
    tm = min(tm, _round_up(M, 8))
    # Keep double-buffered (x tile + out tile) inside the tile budget.
    per_row = 2 * (C_in * dsize_x + C_out * dsize_o)
    max_rows = max(8, (tile_budget // per_row) // 8 * 8)
    tm = min(tm, max_rows)

    grid_m = pl.cdiv(M, tm)

    # Explicit scoped-VMEM limit: double-buffered tiles + resident weight and
    # f32 bias + headroom, independent of the per-generation default limit.
    needed = (2 * tm * C_in * dsize_x
              + 2 * tm * C_out * dsize_o
              + 2 * C_in * C_pad * dsize_w
              + 2 * C_out * 4)
    vmem_limit = int(min(vmem_cap, max(needed + (4 << 20), 32 << 20)))

    out2d = pl.pallas_call(
        _linear_predictor_kernel,
        out_shape=jax.ShapeDtypeStruct((M, C_out), out_dtype),
        grid_spec=pltpu.PrefetchScalarGridSpec(
            num_scalar_prefetch=0,
            grid=(grid_m,),
            in_specs=[
                # TODO(synk): measure-first — pl.Buffered(3) here only if each
                # TC runs >= 3 iterations and input DMA is exposed in a trace.
                pl.BlockSpec((tm, C_in), lambda i: (i, 0)),
                pl.BlockSpec((C_in, C_pad), lambda i: (0, 0)),   # resident
                pl.BlockSpec((1, C_out), lambda i: (0, 0)),      # resident
            ],
            out_specs=pl.BlockSpec((tm, C_out), lambda i: (i, 0)),
        ),
        compiler_params=pltpu.CompilerParams(
            dimension_semantics=("parallel",),
            vmem_limit_bytes=vmem_limit,
        ),
    )(x2d, w_padded, b_row)

    return out2d.reshape(B, T, C_out)


def linear_predictor(x, weight, bias, *, tm=1024, compute_dtype=None, out_dtype=None):
    """Conv1d(k=1) forward. x: (B, T, C_in); weight: (C_out, C_in); bias: (C_out,).

    compute_dtype only narrows the x-read stream; the dominant HBM stream here
    is the output write, so pass out_dtype=jnp.bfloat16 (when the consumer
    tolerates it) for the real traffic win.  Both default to exact f32.
    """
    orig_dtype = x.dtype
    cdt = orig_dtype if compute_dtype is None else jnp.dtype(compute_dtype)
    w, b = prepare_linear_params(weight, bias, param_dtype=cdt)
    x = x.astype(cdt)
    return linear_predictor_prepared(
        x, w, b, tm=tm, out_dtype=orig_dtype if out_dtype is None else out_dtype)


def init_params(key, input_size, output_size=80):
    # Matches nn.Conv1d(input_size, output_size, kernel_size=1) parameter
    # shapes: weight (output_size, input_size, 1) -> squeezed; bias (output_size,).
    kw, kb = jax.random.split(key)
    bound = 1.0 / (input_size ** 0.5)
    weight = jax.random.uniform(kw, (output_size, input_size), jnp.float32,
                                minval=-bound, maxval=bound)
    bias = jax.random.uniform(kb, (output_size,), jnp.float32,
                              minval=-bound, maxval=bound)
    return weight, bias


if __name__ == "__main__":
    key = jax.random.PRNGKey(0)
    k_x, k_p, k_x2 = jax.random.split(key, 3)

    B, T, INPUT_SIZE, OUTPUT_SIZE = 2, 8, 32, 80
    x = jax.random.normal(k_x, (B, T, INPUT_SIZE), jnp.float32)
    weight, bias = init_params(k_p, INPUT_SIZE, OUTPUT_SIZE)

    out = linear_predictor(x, weight, bias)
    out = jax.block_until_ready(out)

    # Reference check in plain JAX (same math as the PyTorch module).
    ref = jnp.einsum("btc,oc->bto", x, weight) + bias
    assert out.shape == (B, T, OUTPUT_SIZE), out.shape
    assert jnp.allclose(out, ref, atol=1e-5, rtol=1e-5)

    # Partial final row-block (M % tm != 0) to exercise Pallas edge masking.
    B2, T2 = 2, 12                                   # M = 24, tm = 16 -> 2 steps
    x2 = jax.random.normal(k_x2, (B2, T2, INPUT_SIZE), jnp.float32)
    out2 = jax.block_until_ready(linear_predictor(x2, weight, bias, tm=16))
    ref2 = jnp.einsum("btc,oc->bto", x2, weight) + bias
    assert jnp.allclose(out2, ref2, atol=1e-5, rtol=1e-5)

    print("KERNEL_OK")
</pallas_src>

<mosaic_0001>
module attributes {stable_mosaic.version = 11 : i64} {
  func.func @_linear_predictor_kernel(%arg0: i32, %arg1: memref<16x32xf32, #tpu.memory_space<vmem>>, %arg2: memref<32x128xf32, #tpu.memory_space<vmem>>, %arg3: memref<1x80xf32, #tpu.memory_space<vmem>>, %arg4: memref<16x80xf32, #tpu.memory_space<vmem>>) attributes {dimension_semantics = [#tpu.dimension_semantics<parallel>], iteration_bounds = array<i64: 1>, scalar_prefetch = 0 : i64, scratch_operands = 0 : i64, tpu.core_type = #tpu.core_type<tc>, window_params = [{transform_indices = @transform_0, window_bounds = array<i64: 16, 32>}, {pipeline_mode = #tpu.pipeline_mode<synchronous>, transform_indices = @transform_1, window_bounds = array<i64: 32, 128>}, {pipeline_mode = #tpu.pipeline_mode<synchronous>, transform_indices = @transform_2, window_bounds = array<i64: 1, 80>}, {transform_indices = @transform_3, window_bounds = array<i64: 16, 80>}]} {
    %c0 = arith.constant 0 : index
    %c0_0 = arith.constant 0 : index
    %0 = vector.load %arg1[%c0, %c0_0] : memref<16x32xf32, #tpu.memory_space<vmem>>, vector<16x32xf32>
    %c0_1 = arith.constant 0 : index
    %c0_2 = arith.constant 0 : index
    %1 = vector.load %arg2[%c0_1, %c0_2] : memref<32x128xf32, #tpu.memory_space<vmem>>, vector<32x128xf32>
    %cst = arith.constant dense<0.000000e+00> : vector<16x128xf32>
    %2 = tpu.matmul %0, %1, %cst {dimension_numbers = #tpu.dot_dimension_numbers<[1], [0], [0], [1], [0, 0, 1, 1], [], []>} : vector<16x32xf32>, vector<32x128xf32>, vector<16x128xf32> -> vector<16x128xf32>
    %3 = vector.extract_strided_slice %2 {offsets = [0, 0], sizes = [16, 80], strides = [1, 1]} : vector<16x128xf32> to vector<16x80xf32>
    %c0_3 = arith.constant 0 : index
    %c0_4 = arith.constant 0 : index
    %4 = vector.load %arg3[%c0_3, %c0_4] : memref<1x80xf32, #tpu.memory_space<vmem>>, vector<1x80xf32>
    %5 = vector.broadcast %4 : vector<1x80xf32> to vector<16x80xf32>
    %6 = arith.addf %3, %5 : vector<16x80xf32>
    %c0_5 = arith.constant 0 : index
    %c0_6 = arith.constant 0 : index
    %7 = vector.load %arg4[%c0_5, %c0_6] : memref<16x80xf32, #tpu.memory_space<vmem>>, vector<16x80xf32>
    tpu.vector_store %arg4[%c0_5, %c0_6], %6 {strides = array<i32>} : memref<16x80xf32, #tpu.memory_space<vmem>>, vector<16x80xf32>,
    return
  }
  func.func @transform_0(%arg0: i32) -> (i32, i32) {
    %c0_i32 = arith.constant 0 : i32
    %c0_i32_0 = arith.constant 0 : i32
    return %arg0, %c0_i32 : i32, i32
  }
  func.func @transform_1(%arg0: i32) -> (i32, i32) {
    %c0_i32 = arith.constant 0 : i32
    %c0_i32_0 = arith.constant 0 : i32
    %c0_i32_1 = arith.constant 0 : i32
    return %c0_i32, %c0_i32_0 : i32, i32
  }
  func.func @transform_2(%arg0: i32) -> (i32, i32) {
    %c0_i32 = arith.constant 0 : i32
    %c0_i32_0 = arith.constant 0 : i32
    %c0_i32_1 = arith.constant 0 : i32
    return %c0_i32, %c0_i32_0 : i32, i32
  }
  func.func @transform_3(%arg0: i32) -> (i32, i32) {
    %c0_i32 = arith.constant 0 : i32
    %c0_i32_0 = arith.constant 0 : i32
    return %arg0, %c0_i32 : i32, i32
  }
}

</mosaic_0001>

<llo_original>
// kernel: tpu_custom_call.1
$region0: #{tpu_custom_call.1}
  #allocation0 [shape = 'u32[]', space=smem, size = 0x4, offset = 0x4, fixed_abs, tag = 'smem constant byte address 0x4 - core index']
  #allocation1 [shape = 'u32[144,128]{1,0:T(1,128)}', space=vmem, size = 0x12000, scoped, tag = 'internal scratch']
  %s0 = inlined_call_operand.hbm [shape: f32[16,32], index: 0, kind: input, shape index: {}]
  %s1 = inlined_call_operand.hbm [shape: f32[32,128], index: 1, kind: input, shape index: {}]
  %s2 = inlined_call_operand.vmem [shape: f32[1,80], index: 2, kind: input, shape index: {}]
  %s3 = inlined_call_operand.hbm [shape: f32[16,80], index: 3, kind: output, shape index: {}]
  %s4 = sld [smem:[#allocation0]]
  $region30: #{tpu_custom_call.1} parent=0
    _
  %s6 = ssub.s32 1, %s4
  %s7 = scalar_select 0, %s6, %s4
  $region1: #{tpu_custom_call.1} parent=0
    #allocation2 [shape = 'u8[8192]{0}', space=vmem, size = 0x2000, scoped, tag = 'input window, operand 0, single buffered']
    #allocation3 [shape = 's32[1]{0}', space=sflag, size = 0x4, scoped, tag = 'scoped memory for tpu_custom_call.1']
    #allocation4 [shape = 's32[1]{0}', space=sflag, size = 0x4, scoped, tag = 'scoped memory for tpu_custom_call.1']
    #allocation5 [shape = 'u8[16384]{0}', space=vmem, size = 0x4000, scoped, tag = 'input window, operand 1, single buffered']
    #allocation6 [shape = 's32[1]{0}', space=sflag, size = 0x4, scoped, tag = 'scoped memory for tpu_custom_call.1']
    #allocation7 [shape = 'u8[8192]{0}', space=vmem, size = 0x2000, scoped, tag = 'output window, operand 0, single buffered']
    %8 = vsyncpa [#allocation3], 0
    %9 = vsyncpa [#allocation6], 0
    %10 = vsyncpa [#allocation4], 0
    // Predicated region
    $region2: #{tpu_custom_call.1} parent=1 // pred_check
      _
    $region3: #{tpu_custom_call.1} parent=1 // pred_check_branch
      %12 = sbr.rel (0) target = $region5
    $region4: #{tpu_custom_call.1} parent=1 // pred_region
      %s14 = ssub.s32 256, 256
      %15 = vsyncadd [#allocation3], %s14
      %s16 = sshll.u32 [#allocation2], 4
      %s17 = int_to_ptr.vmem [resolvable:$true] %s16
      %22 = dma.hbm_to_vmem [thread:$0]  %s0, 256, %s17, [#allocation3], 128, 128, 8
    $region5: #{tpu_custom_call.1} parent=1 // pred_fallthru
      _
    // Predicated region
    $region6: #{tpu_custom_call.1} parent=1 // pred_check
      _
    $region7: #{tpu_custom_call.1} parent=1 // pred_check_branch
      %24 = sbr.rel (0) target = $region9
    $region8: #{tpu_custom_call.1} parent=1 // pred_region
      %s26 = ssub.s32 512, 512
      %27 = vsyncadd [#allocation6], %s26
      %s28 = sshll.u32 [#allocation5], 4
      %s29 = int_to_ptr.vmem [resolvable:$true] %s28
      %34 = dma.hbm_to_vmem [thread:$0]  %s1, 512, %s29, [#allocation6], 128, 128, 8
    $region9: #{tpu_custom_call.1} parent=1 // pred_fallthru
      _
    // Predicated region
    $region10: #{tpu_custom_call.1} parent=1 // pred_check
      _
    $region11: #{tpu_custom_call.1} parent=1 // pred_check_branch
      %36 = sbr.rel (0) target = $region13
    $region12: #{tpu_custom_call.1} parent=1 // pred_region
      _
    $region13: #{tpu_custom_call.1} parent=1 // pred_fallthru
      _
    // Predicated region
    $region14: #{tpu_custom_call.1} parent=1 // pred_check
      _
    $region15: #{tpu_custom_call.1} parent=1 // pred_check_branch
      %38 = sbr.rel (0) target = $region17
    $region16: #{tpu_custom_call.1} parent=1 // pred_region
      %39 = dma.done [#allocation3], 256
    $region17: #{tpu_custom_call.1} parent=1 // pred_fallthru
      _
    // Predicated region
    $region18: #{tpu_custom_call.1} parent=1 // pred_check
      _
    $region19: #{tpu_custom_call.1} parent=1 // pred_check_branch
      %41 = sbr.rel (0) target = $region21
    $region20: #{tpu_custom_call.1} parent=1 // pred_region
      %42 = dma.done [#allocation6], 512
    $region21: #{tpu_custom_call.1} parent=1 // pred_fallthru
      _
    %v43 = vld [vmem:[#allocation2] sm:$0xff]
    %v44 = vld [vmem:[#allocation2 + $0x8] sm:$0xff]
    %v45 = vld [vmem:[#allocation5] sm:$0xff]
    %v46 = vld [vmem:[#allocation5 + $0x8] sm:$0xff]
    %v47 = vld [vmem:[#allocation5 + $0x10] sm:$0xff]
    %v48 = vld [vmem:[#allocation5 + $0x18] sm:$0xff]
    %vm49 = vcmask 261120
    %v51 = vsel %vm49, %v43, 0
    %v54 = vsel %vm49, %v44, 0
    %56 = vmatprep.subr.mxu0 0.0
    %57 = vmatpush1.msra.mxu0 %v45
    %58 = vmatprep.subr.mxu0 0.0
    %59 = vmatpush1.msra.mxu0 %v46
    %60 = vmatprep.subr.mxu0 0.0
    %61 = vmatpush1.msra.mxu0 %v47
    %62 = vmatprep.subr.mxu0 0.0
    %63 = vmatpush1.msra.mxu0 %v48
    %64 = vmatprep.subr.mxu0 0.0
    %65 = vmatpush1.msra.mxu0 0.0
    %66 = vmatprep.subr.mxu0 0.0
    %67 = vmatpush1.msra.mxu0 0.0
    %68 = vmatprep.subr.mxu0 0.0
    %69 = vmatpush1.msra.mxu0 0.0
    %70 = vmatprep.subr.mxu0 0.0
    %71 = vmatpush1.msra.mxu0 0.0
    %72 = vmatprep.subr.mxu0 0.0
    %73 = vmatpush1.msra.mxu0 0.0
    %74 = vmatprep.subr.mxu0 0.0
    %75 = vmatpush1.msra.mxu0 0.0
    %76 = vmatprep.subr.mxu0 0.0
    %77 = vmatpush1.msra.mxu0 0.0
    %78 = vmatprep.subr.mxu0 0.0
    %79 = vmatpush1.msra.mxu0 0.0
    %80 = vmatprep.subr.mxu0 0.0
    %81 = vmatpush1.msra.mxu0 0.0
    %82 = vmatprep.subr.mxu0 0.0
    %83 = vmatpush1.msra.mxu0 0.0
    %84 = vmatprep.subr.mxu0 0.0
    %85 = vmatpush1.msra.mxu0 0.0
    %86 = vmatprep.subr.mxu0 0.0
    %87 = vmatpush1.msra.mxu0 0.0
    %88 = vmatprep.subr.mxu0 0.0
    %89 = vmatpush1.msra.mxu0 0.0
    %90 = vmatprep.subr.mxu0 0.0
    %91 = vmatpush1.msra.mxu0 0.0
    %92 = vmatprep.subr.mxu0 0.0
    %93 = vmatpush1.msra.mxu0 0.0
    %94 = vmatprep.subr.mxu0 0.0
    %95 = vmatpush1.msra.mxu0 0.0
    %96 = vmatprep.subr.mxu0 0.0
    %97 = vmatpush1.msra.mxu0 0.0
    %98 = vmatprep.subr.mxu0 0.0
    %99 = vmatpush1.msra.mxu0 0.0
    %100 = vmatprep.subr.mxu0 0.0
    %101 = vmatpush1.msra.mxu0 0.0
    %102 = vmatprep.subr.mxu0 0.0
    %103 = vmatpush1.msra.mxu0 0.0
    %104 = vmatprep.subr.mxu0 0.0
    %105 = vmatpush1.msra.mxu0 0.0
    %106 = vmatprep.subr.mxu0 0.0
    %107 = vmatpush1.msra.mxu0 0.0
    %108 = vmatprep.subr.mxu0 0.0
    %109 = vmatpush1.msra.mxu0 0.0
    %110 = vmatprep.subr.mxu0 0.0
    %111 = vmatpush1.msra.mxu0 0.0
    %112 = vmatprep.subr.mxu0 0.0
    %113 = vmatpush1.msra.mxu0 0.0
    %114 = vmatprep.subr.mxu0 0.0
    %115 = vmatpush1.msra.mxu0 0.0
    %116 = vmatprep.subr.mxu0 0.0
    %117 = vmatpush1.msra.mxu0 0.0
    %118 = vmatprep.subr.mxu0 0.0
    %119 = vmatpush1.msra.mxu0 0.0
    %120 = vmatprep.mubr.f32.mxu0 0.0
    %121 = vmatmul.mubr.f32.gmra.mrb[0].mxu0 %v51
    %v122 = vpop.f32.mrb[0].mxu0
    %v123 = vadd.f32 0.0, %v122
    %v124 = vpop.f32.mrb[0].mxu0
    %125 = vmatprep.mubr.f32.mxu0 0.0
    %126 = vmatmul.mubr.f32.gmra.mrb[0].mxu0 %v54
    %v127 = vpop.f32.mrb[0].mxu0
    %v128 = vadd.f32 0.0, %v127
    %v129 = vpop.f32.mrb[0].mxu0
    %130 = vdwg.mxu0
    %v131 = vld [vmem:[%s2] sm:$0x1]
    %v133 = vlaneseq
    %v134 = vshrl.u32 %v133, 7
    %v135 = vsub.s32 0, %v134
    %v136 = vrot.slane %v131, %v135
    %v138 = vadd.f32 %v123, %v136
    %v139 = vadd.f32 %v128, %v136
    %vm140 = vcmask 654336
    %141 = vst.msk [vmem:[#allocation7] sm:$0xff] %vm140, %v138
    %142 = vst.msk [vmem:[#allocation7 + $0x8] sm:$0xff] %vm140, %v139
    // Predicated region
    $region22: #{tpu_custom_call.1} parent=1 // pred_check
      _
    $region23: #{tpu_custom_call.1} parent=1 // pred_check_branch
      %144 = sbr.rel (0) target = $region25
    $region24: #{tpu_custom_call.1} parent=1 // pred_region
      %s146 = ssub.s32 256, 256
      %147 = vsyncadd [#allocation4], %s146
      %s148 = sshll.u32 [#allocation7], 4
      %s149 = int_to_ptr.vmem [resolvable:$true] %s148
      %154 = dma.vmem_to_hbm [thread:$0]  %s149, 256, %s3, [#allocation4], 128, 128, 8
    $region25: #{tpu_custom_call.1} parent=1 // pred_fallthru
      _
    // Predicated region
    $region26: #{tpu_custom_call.1} parent=1 // pred_check
      _
    $region27: #{tpu_custom_call.1} parent=1 // pred_check_branch
      %156 = sbr.rel (0) target = $region29
    $region28: #{tpu_custom_call.1} parent=1 // pred_region
      %157 = dma.done [#allocation4], 256
    $region29: #{tpu_custom_call.1} parent=1 // pred_fallthru
      _
    %158 = vsyncpa [#allocation3], 1
    %159 = vsyncpa [#allocation6], 1
    %160 = vsyncpa [#allocation4], 1

</llo_original>
